<compile_context>
chip_gen: v5e
topology: v5e:2x2
jax: 0.10.0
libtpu: 0.0.40
codegen_flags: <defaults>
</compile_context>

<pallas_src>
import numpy as np
import jax
import jax.numpy as jnp
from jax.experimental import pallas as pl
from jax.experimental.pallas import tpu as pltpu

HIDDEN1 = 512
HIDDEN2 = 256


def _round_up(n, m):
    return ((n + m - 1) // m) * m


def _supports_buffered():
    """Explicit feature check (not except-Exception around the pallas_call) for
    single-buffered resident weights via pipeline_mode=pl.Buffered(1)."""
    if not hasattr(pl, "Buffered"):
        return False
    try:
        pl.BlockSpec((8, 128), lambda i: (0, 0), pipeline_mode=pl.Buffered(1))
    except TypeError:
        return False
    return True


_HAS_BUFFERED = _supports_buffered()


def _tpu_vmem_budget_bytes():
    """Generation-aware VMEM budget: ~3/4 of physical capacity (v5e/v6e: 128 MiB
    -> ~96 MiB; v7x: 64 MiB -> ~48 MiB). Conservative 48 MiB fallback."""
    try:
        cap = int(pltpu.get_tpu_info().vmem_capacity_bytes)
        return max(32 * 1024 * 1024, (cap * 3) // 4)
    except Exception:
        return 48 * 1024 * 1024


def _mlp_kernel(x_ref, w1_ref, b1_ref, w2_ref, b2_ref, w3_ref, b3_ref, o_ref):
    # x_ref: (TB, d_in_p); w1: (d_in_p, 512); w2: (512, 256); w3: (256, d_out_p)
    x = x_ref[...]

    h1 = jnp.dot(x, w1_ref[...], preferred_element_type=jnp.float32)
    h1 = h1 + b1_ref[...]                      # (TB, 512) + (1, 512), f32
    h1 = jnp.maximum(h1, 0.0)                  # ReLU
    # Dropout(p=0.2): identity in eval mode.
    h1 = h1.astype(w2_ref.dtype)               # back to compute dtype for MXU

    h2 = jnp.dot(h1, w2_ref[...], preferred_element_type=jnp.float32)
    h2 = h2 + b2_ref[...]                      # (TB, 256) + (1, 256), f32
    h2 = jnp.maximum(h2, 0.0)                  # ReLU
    # Dropout(p=0.2): identity in eval mode.
    h2 = h2.astype(w3_ref.dtype)

    logits = jnp.dot(h2, w3_ref[...], preferred_element_type=jnp.float32)
    logits = logits + b3_ref[...]              # (TB, d_out_p) + (1, d_out_p)
    o_ref[...] = logits.astype(o_ref.dtype)


def sk_predictor_forward(x, params, *, tile_b=1024,
                         compute_dtype=jnp.float32,
                         out_dtype=jnp.float32,
                         vmem_budget_bytes=None):
    """x: (B, input_dim) float32.  params: dict of w1,b1,w2,b2,w3,b3 (weights
    stored (in_features, out_features)).

    compute_dtype=jnp.bfloat16 is recommended on ALL generations (v5e/v6e/v7x
    MXUs are bf16-native); accumulation stays f32 via preferred_element_type.
    out_dtype lets the caller take bf16 outputs to halve store traffic.
    """
    B, d_in = x.shape
    d_out = params["w3"].shape[1]

    d_in_p = _round_up(d_in, 128)              # lane-dense x loads, aligned K
    d_out_p = _round_up(d_out, 128)            # lane-dense (unmasked vst) stores

    if vmem_budget_bytes is None:
        vmem_budget_bytes = _tpu_vmem_budget_bytes()

    itemsize = np.dtype(compute_dtype).itemsize
    out_itemsize = np.dtype(out_dtype).itemsize
    weight_bufs = 1 if _HAS_BUFFERED else 2    # fallback double-buffers weights

    def _vmem_estimate(t):
        weights = (d_in_p * HIDDEN1 + HIDDEN1 * HIDDEN2
                   + HIDDEN2 * d_out_p) * itemsize * weight_bufs
        biases = (HIDDEN1 + HIDDEN2 + d_out_p) * 4 * weight_bufs
        acts = 2 * t * d_in_p * itemsize + 2 * t * d_out_p * out_itemsize
        # f32 intermediates + compute-dtype copies of h1/h2 fed back to the MXU.
        interm = (t * (HIDDEN1 + HIDDEN2 + d_out_p) * 4
                  + t * (HIDDEN1 + HIDDEN2) * itemsize)
        return weights + biases + acts + interm

    # Batch tile: largest multiple of 8 that (a) fits VMEM, (b) <= padded batch,
    # (c) leaves >=2 grid steps for moderate batches so the "parallel" axis can
    # shard across both TensorCores on v7x.
    B_p8 = _round_up(B, 8)
    tb = _round_up(min(max(tile_b, 8), B_p8), 8)
    if B_p8 >= 16 and tb >= B_p8:
        tb = _round_up((B_p8 + 1) // 2, 8)
    while tb > 8 and _vmem_estimate(tb) > vmem_budget_bytes:
        tb = max(8, (tb // 2 // 8) * 8)

    B_p = _round_up(B, tb)
    grid = (B_p // tb,)

    # Pad: batch rows (zeros), input columns (zeros, x cols + w1 rows), output
    # columns (zeros, w3/b3 cols).  All padding is sliced away after the call.
    xp = x.astype(compute_dtype)
    if B_p != B or d_in_p != d_in:
        xp = jnp.pad(xp, ((0, B_p - B), (0, d_in_p - d_in)))
    w1 = params["w1"]
    if d_in_p != d_in:
        w1 = jnp.pad(w1, ((0, d_in_p - d_in), (0, 0)))
    w3, b3 = params["w3"], params["b3"]
    if d_out_p != d_out:
        w3 = jnp.pad(w3, ((0, 0), (0, d_out_p - d_out)))
        b3 = jnp.pad(b3, ((0, 0), (0, d_out_p - d_out)))

    w1 = w1.astype(compute_dtype)
    w2 = params["w2"].astype(compute_dtype)
    w3 = w3.astype(compute_dtype)
    b1, b2 = params["b1"], params["b2"]        # biases stay f32

    if _HAS_BUFFERED:
        # Constant index_map -> these operands never change between grid steps;
        # a single VMEM buffer is enough (halves resident weight footprint).
        const = lambda shape: pl.BlockSpec(shape, lambda i: (0, 0),
                                           pipeline_mode=pl.Buffered(1))
    else:
        const = lambda shape: pl.BlockSpec(shape, lambda i: (0, 0))

    flops = 2 * B_p * (d_in_p * HIDDEN1 + HIDDEN1 * HIDDEN2 + HIDDEN2 * d_out_p)
    bytes_accessed = (
        B_p * d_in_p * itemsize
        + (d_in_p * HIDDEN1 + HIDDEN1 * HIDDEN2 + HIDDEN2 * d_out_p) * itemsize
        + (HIDDEN1 + HIDDEN2 + d_out_p) * 4
        + B_p * d_out_p * out_itemsize)

    out = pl.pallas_call(
        _mlp_kernel,
        out_shape=jax.ShapeDtypeStruct((B_p, d_out_p), out_dtype),
        grid_spec=pl.GridSpec(
            grid=grid,
            in_specs=[
                pl.BlockSpec((tb, d_in_p), lambda i: (i, 0)),   # x tile
                const((d_in_p, HIDDEN1)),                       # w1 (padded rows)
                const((1, HIDDEN1)),                            # b1
                const((HIDDEN1, HIDDEN2)),                      # w2
                const((1, HIDDEN2)),                            # b2
                const((HIDDEN2, d_out_p)),                      # w3 (padded cols)
                const((1, d_out_p)),                            # b3 (padded cols)
            ],
            out_specs=pl.BlockSpec((tb, d_out_p), lambda i: (i, 0)),
        ),
        compiler_params=pltpu.CompilerParams(
            dimension_semantics=("parallel",),   # batch tiles shard across TCs (v7x)
            vmem_limit_bytes=int(vmem_budget_bytes),
        ),
        cost_estimate=pl.CostEstimate(
            flops=int(flops),
            transcendentals=0,
            bytes_accessed=int(bytes_accessed),
        ),
    )(xp, w1, b1, w2, b2, w3, b3)

    return out[:B, :d_out]


def init_params(key, input_dim, output_dim):
    """Deterministic init mimicking PyTorch Linear (uniform +/- 1/sqrt(fan_in)).
    Weights stored transposed: (in_features, out_features)."""
    def linear(k, fan_in, fan_out):
        kw, kb = jax.random.split(k)
        bound = 1.0 / jnp.sqrt(fan_in)
        w = jax.random.uniform(kw, (fan_in, fan_out), jnp.float32, -bound, bound)
        b = jax.random.uniform(kb, (1, fan_out), jnp.float32, -bound, bound)
        return w, b

    k1, k2, k3 = jax.random.split(key, 3)
    w1, b1 = linear(k1, input_dim, HIDDEN1)
    w2, b2 = linear(k2, HIDDEN1, HIDDEN2)
    w3, b3 = linear(k3, HIDDEN2, output_dim)
    return {"w1": w1, "b1": b1, "w2": w2, "b2": b2, "w3": w3, "b3": b3}


def reference_forward(x, p):
    h1 = jnp.maximum(x @ p["w1"] + p["b1"], 0.0)
    h2 = jnp.maximum(h1 @ p["w2"] + p["b2"], 0.0)
    return h2 @ p["w3"] + p["b3"]


if __name__ == "__main__":
    key = jax.random.PRNGKey(0)
    k_x, k_p = jax.random.split(key)

    # Small demo shapes; batch=20 is NOT a multiple of 8, input_dim=100 and
    # output_dim=64 are NOT multiples of 128, to exercise every padding path.
    batch, input_dim, output_dim = 20, 100, 64
    x = jax.random.normal(k_x, (batch, input_dim), jnp.float32)
    params = init_params(k_p, input_dim, output_dim)

    ref = reference_forward(x, params)

    # f32 path (exact semantics of the PyTorch module in eval mode).
    out = jax.block_until_ready(sk_predictor_forward(x, params))
    assert out.shape == (batch, output_dim)
    assert jnp.allclose(out, ref, atol=1e-4, rtol=1e-4), "mismatch vs JAX reference"

    # bf16-weight/activation path (recommended on v5e/v6e/v7x): f32 accumulation,
    # loose tolerance because inputs are also quantized to bf16.
    out_bf16 = jax.block_until_ready(
        sk_predictor_forward(x, params, compute_dtype=jnp.bfloat16))
    assert out_bf16.shape == (batch, output_dim)
    assert bool(jnp.all(jnp.isfinite(out_bf16)))
    assert jnp.allclose(out_bf16, ref, atol=0.25, rtol=0.1), "bf16 path diverged"

    print("KERNEL_OK")
</pallas_src>

<mosaic_0001>
module attributes {stable_mosaic.version = 11 : i64} {
  func.func @_mlp_kernel(%arg0: i32, %arg1: memref<16x128xf32, #tpu.memory_space<vmem>>, %arg2: memref<128x512xf32, #tpu.memory_space<vmem>>, %arg3: memref<1x512xf32, #tpu.memory_space<vmem>>, %arg4: memref<512x256xf32, #tpu.memory_space<vmem>>, %arg5: memref<1x256xf32, #tpu.memory_space<vmem>>, %arg6: memref<256x128xf32, #tpu.memory_space<vmem>>, %arg7: memref<1x128xf32, #tpu.memory_space<vmem>>, %arg8: memref<16x128xf32, #tpu.memory_space<vmem>>) attributes {dimension_semantics = [#tpu.dimension_semantics<parallel>], iteration_bounds = array<i64: 2>, scalar_prefetch = 0 : i64, scratch_operands = 0 : i64, tpu.core_type = #tpu.core_type<tc>, window_params = [{transform_indices = @transform_0, window_bounds = array<i64: 16, 128>}, {pipeline_mode = #tpu.pipeline_mode<synchronous>, transform_indices = @transform_1, window_bounds = array<i64: 128, 512>}, {pipeline_mode = #tpu.pipeline_mode<synchronous>, transform_indices = @transform_2, window_bounds = array<i64: 1, 512>}, {pipeline_mode = #tpu.pipeline_mode<synchronous>, transform_indices = @transform_3, window_bounds = array<i64: 512, 256>}, {pipeline_mode = #tpu.pipeline_mode<synchronous>, transform_indices = @transform_4, window_bounds = array<i64: 1, 256>}, {pipeline_mode = #tpu.pipeline_mode<synchronous>, transform_indices = @transform_5, window_bounds = array<i64: 256, 128>}, {pipeline_mode = #tpu.pipeline_mode<synchronous>, transform_indices = @transform_6, window_bounds = array<i64: 1, 128>}, {transform_indices = @transform_7, window_bounds = array<i64: 16, 128>}]} {
    %c0 = arith.constant 0 : index
    %c0_0 = arith.constant 0 : index
    %0 = vector.load %arg1[%c0, %c0_0] : memref<16x128xf32, #tpu.memory_space<vmem>>, vector<16x128xf32>
    %c0_1 = arith.constant 0 : index
    %c0_2 = arith.constant 0 : index
    %1 = vector.load %arg2[%c0_1, %c0_2] : memref<128x512xf32, #tpu.memory_space<vmem>>, vector<128x512xf32>
    %cst = arith.constant dense<0.000000e+00> : vector<16x512xf32>
    %2 = tpu.matmul %0, %1, %cst {dimension_numbers = #tpu.dot_dimension_numbers<[1], [0], [0], [1], [0, 0, 1, 1], [], []>} : vector<16x128xf32>, vector<128x512xf32>, vector<16x512xf32> -> vector<16x512xf32>
    %c0_3 = arith.constant 0 : index
    %c0_4 = arith.constant 0 : index
    %3 = vector.load %arg3[%c0_3, %c0_4] : memref<1x512xf32, #tpu.memory_space<vmem>>, vector<1x512xf32>
    %4 = vector.broadcast %3 : vector<1x512xf32> to vector<16x512xf32>
    %5 = arith.addf %2, %4 : vector<16x512xf32>
    %cst_5 = arith.constant 0.000000e+00 : f32
    %6 = vector.broadcast %cst_5 : f32 to vector<16x512xf32>
    %7 = arith.maximumf %5, %6 : vector<16x512xf32>
    %c0_6 = arith.constant 0 : index
    %c0_7 = arith.constant 0 : index
    %8 = vector.load %arg4[%c0_6, %c0_7] : memref<512x256xf32, #tpu.memory_space<vmem>>, vector<512x256xf32>
    %cst_8 = arith.constant dense<0.000000e+00> : vector<16x256xf32>
    %9 = tpu.matmul %7, %8, %cst_8 {dimension_numbers = #tpu.dot_dimension_numbers<[1], [0], [0], [1], [0, 0, 1, 1], [], []>} : vector<16x512xf32>, vector<512x256xf32>, vector<16x256xf32> -> vector<16x256xf32>
    %c0_9 = arith.constant 0 : index
    %c0_10 = arith.constant 0 : index
    %10 = vector.load %arg5[%c0_9, %c0_10] : memref<1x256xf32, #tpu.memory_space<vmem>>, vector<1x256xf32>
    %11 = vector.broadcast %10 : vector<1x256xf32> to vector<16x256xf32>
    %12 = arith.addf %9, %11 : vector<16x256xf32>
    %cst_11 = arith.constant 0.000000e+00 : f32
    %13 = vector.broadcast %cst_11 : f32 to vector<16x256xf32>
    %14 = arith.maximumf %12, %13 : vector<16x256xf32>
    %c0_12 = arith.constant 0 : index
    %c0_13 = arith.constant 0 : index
    %15 = vector.load %arg6[%c0_12, %c0_13] : memref<256x128xf32, #tpu.memory_space<vmem>>, vector<256x128xf32>
    %cst_14 = arith.constant dense<0.000000e+00> : vector<16x128xf32>
    %16 = tpu.matmul %14, %15, %cst_14 {dimension_numbers = #tpu.dot_dimension_numbers<[1], [0], [0], [1], [0, 0, 1, 1], [], []>} : vector<16x256xf32>, vector<256x128xf32>, vector<16x128xf32> -> vector<16x128xf32>
    %c0_15 = arith.constant 0 : index
    %c0_16 = arith.constant 0 : index
    %17 = vector.load %arg7[%c0_15, %c0_16] : memref<1x128xf32, #tpu.memory_space<vmem>>, vector<1x128xf32>
    %18 = vector.broadcast %17 : vector<1x128xf32> to vector<16x128xf32>
    %19 = arith.addf %16, %18 : vector<16x128xf32>
    %c0_17 = arith.constant 0 : index
    %c0_18 = arith.constant 0 : index
    %20 = vector.load %arg8[%c0_17, %c0_18] : memref<16x128xf32, #tpu.memory_space<vmem>>, vector<16x128xf32>
    tpu.vector_store %arg8[%c0_17, %c0_18], %19 {strides = array<i32>} : memref<16x128xf32, #tpu.memory_space<vmem>>, vector<16x128xf32>,
    return
  }
  func.func @transform_0(%arg0: i32) -> (i32, i32) {
    %c0_i32 = arith.constant 0 : i32
    %c0_i32_0 = arith.constant 0 : i32
    return %arg0, %c0_i32 : i32, i32
  }
  func.func @transform_1(%arg0: i32) -> (i32, i32) {
    %c0_i32 = arith.constant 0 : i32
    %c0_i32_0 = arith.constant 0 : i32
    %c0_i32_1 = arith.constant 0 : i32
    return %c0_i32, %c0_i32_0 : i32, i32
  }
  func.func @transform_2(%arg0: i32) -> (i32, i32) {
    %c0_i32 = arith.constant 0 : i32
    %c0_i32_0 = arith.constant 0 : i32
    %c0_i32_1 = arith.constant 0 : i32
    return %c0_i32, %c0_i32_0 : i32, i32
  }
  func.func @transform_3(%arg0: i32) -> (i32, i32) {
    %c0_i32 = arith.constant 0 : i32
    %c0_i32_0 = arith.constant 0 : i32
    %c0_i32_1 = arith.constant 0 : i32
    return %c0_i32, %c0_i32_0 : i32, i32
  }
  func.func @transform_4(%arg0: i32) -> (i32, i32) {
    %c0_i32 = arith.constant 0 : i32
    %c0_i32_0 = arith.constant 0 : i32
    %c0_i32_1 = arith.constant 0 : i32
    return %c0_i32, %c0_i32_0 : i32, i32
  }
  func.func @transform_5(%arg0: i32) -> (i32, i32) {
    %c0_i32 = arith.constant 0 : i32
    %c0_i32_0 = arith.constant 0 : i32
    %c0_i32_1 = arith.constant 0 : i32
    return %c0_i32, %c0_i32_0 : i32, i32
  }
  func.func @transform_6(%arg0: i32) -> (i32, i32) {
    %c0_i32 = arith.constant 0 : i32
    %c0_i32_0 = arith.constant 0 : i32
    %c0_i32_1 = arith.constant 0 : i32
    return %c0_i32, %c0_i32_0 : i32, i32
  }
  func.func @transform_7(%arg0: i32) -> (i32, i32) {
    %c0_i32 = arith.constant 0 : i32
    %c0_i32_0 = arith.constant 0 : i32
    return %arg0, %c0_i32 : i32, i32
  }
}

</mosaic_0001>

<llo_original>
// kernel: tpu_custom_call.1
$region0: #{tpu_custom_call.1}
  #allocation0 [shape = 'u32[]', space=smem, size = 0x4, offset = 0x4, fixed_abs, tag = 'smem constant byte address 0x4 - core index']
  #allocation1 [shape = 'u32[72,128]{1,0:T(1,128)}', space=vmem, size = 0x9000, scoped, tag = 'internal scratch']
  %s0 = inlined_call_operand.hbm [shape: f32[32,128], index: 0, kind: input, shape index: {}]
  %s1 = inlined_call_operand.hbm [shape: f32[128,512], index: 1, kind: input, shape index: {}]
  %s2 = inlined_call_operand.hbm [shape: f32[1,512], index: 2, kind: input, shape index: {}]
  %s3 = inlined_call_operand.hbm [shape: f32[512,256], index: 3, kind: input, shape index: {}]
  %s4 = inlined_call_operand.vmem [shape: f32[1,256], index: 4, kind: input, shape index: {}]
  %s5 = inlined_call_operand.hbm [shape: f32[256,128], index: 5, kind: input, shape index: {}]
  %s6 = inlined_call_operand.vmem [shape: f32[1,128], index: 6, kind: input, shape index: {}]
  %s7 = inlined_call_operand.hbm [shape: f32[32,128], index: 7, kind: output, shape index: {}]
  %s8 = sld [smem:[#allocation0]]
  $region81: #{tpu_custom_call.1} parent=0
    _
  %s10 = ssub.s32 1, %s8
  %s11 = scalar_select 0, %s10, %s8
  $region1: #{tpu_custom_call.1} parent=0
    #allocation2 [shape = 'u8[16384]{0}', space=vmem, size = 0x4000, scoped, tag = 'input window, operand 0']
    #allocation3 [shape = 's32[2]{0}', space=sflag, size = 0x8, scoped, tag = 'scoped memory for tpu_custom_call.1']
    #allocation4 [shape = 's32[2]{0}', space=sflag, size = 0x8, scoped, tag = 'scoped memory for tpu_custom_call.1']
    #allocation5 [shape = 'u8[262144]{0}', space=vmem, size = 0x40000, scoped, tag = 'input window, operand 1, single buffered']
    #allocation6 [shape = 's32[1]{0}', space=sflag, size = 0x4, scoped, tag = 'scoped memory for tpu_custom_call.1']
    #allocation7 [shape = 'u8[2048]{0}', space=vmem, size = 0x800, scoped, tag = 'input window, operand 2, single buffered']
    #allocation8 [shape = 'u8[524288]{0}', space=vmem, size = 0x80000, scoped, tag = 'input window, operand 3, single buffered']
    #allocation9 [shape = 's32[1]{0}', space=sflag, size = 0x4, scoped, tag = 'scoped memory for tpu_custom_call.1']
    #allocation10 [shape = 'u8[131072]{0}', space=vmem, size = 0x20000, scoped, tag = 'input window, operand 5, single buffered']
    #allocation11 [shape = 'u8[16384]{0}', space=vmem, size = 0x4000, scoped, tag = 'output window, operand 0']
    %12 = vsyncpa [#allocation3], 0
    %s13 = scalar_lea.sflag [#allocation3], 1
    %14 = vsyncpa %s13, 0
    %15 = vsyncpa [#allocation6], 0
    %16 = vsyncpa [#allocation9], 0
    %17 = vsyncpa [#allocation4], 0
    %s18 = scalar_lea.sflag [#allocation4], 1
    %19 = vsyncpa %s18, 0
    loop: start=0, step=1, limit=4
    $region2: #{tpu_custom_call.1} parent=1 // loop_pre_header
      _
    $region3: #{tpu_custom_call.1} parent=1 // loop_header
      %s21 = sphi 0, %s25
      %p22 = scmp.ge.s32.totalorder %s21, 4
      %s31 = sphi 0, %s33
      %s34 = sphi 0, %s31
      %s35 = sphi 0, %s34
      %s51 = sphi 0, %s35
      %s55 = sphi 0, %s55
      %s57 = sphi 0, %s55
      %s58 = sphi 0, %s57
      %s72 = sphi 0, %s58
      %s76 = sphi 0, %s76
      %s78 = sphi 0, %s76
      %s79 = sphi 0, %s78
      %s93 = sphi 0, %s79
      %s97 = sphi 0, %s97
      %s99 = sphi 0, %s97
      %s100 = sphi 0, %s99
      %s114 = sphi 0, %s100
      %s118 = sphi 0, %s118
      %s120 = sphi 0, %s118
      %s121 = sphi 0, %s120
      %s135 = sphi 0, %s121
      %s139 = sphi 0, %s139
      %s141 = sphi 0, %s139
      %s142 = sphi 0, %s141
      %s156 = sphi 0, %s142
      %s160 = sphi 0, %s160
      %s162 = sphi 0, %s160
      %s163 = sphi 0, %s162
      %s177 = sphi 0, %s163
      %s183 = sphi 0, %s185
      %s186 = sphi 0, %s183
      %s187 = sphi 0, %s186
      %s203 = sphi 0, %s187
    $region4: #{tpu_custom_call.1} parent=1 // loop_header_branch
      %24 = sbr.rel (%p22) target = $region8
    $region5: #{tpu_custom_call.1} parent=1 // loop_body
      %s26 = ssub.s32 %s21, 1
      %s27 = ssub.s32 %s21, 2
      %s28 = sadd.s32 %s21, 1
      %s29 = ssub.s32 %s21, %s28
      %p30 = scmp.eq.s32.totalorder %s29, 0
      %s32 = sadd.s32 %s31, 1
      %s33 = scalar_select %p30, %s31, %s32
      %p36 = pneg %p30
      %p37 = scmp.eq.s32.totalorder %s21, 1
      %p38 = por %p36, %p37
      %p39 = scmp.ne.s32.totalorder %s31, %s34
      %p40 = scmp.eq.s32.totalorder %s21, 0
      %p41 = por %p39, %p40
      %p42 = scmp.ne.s32.totalorder %s31, %s34
      %p43 = scmp.eq.s32.totalorder %s26, 1
      %p44 = por %p42, %p43
      %p45 = scmp.ne.s32.totalorder %s34, %s35
      %p46 = scmp.eq.s32.totalorder %s26, 0
      %p47 = por %p45, %p46
      %p48 = scmp.ne.s32.totalorder %s34, %s35
      %p49 = scmp.eq.s32.totalorder %s27, 1
      %p50 = por %p48, %p49
      %p52 = scmp.ne.s32.totalorder %s35, %s51
      %p53 = scmp.eq.s32.totalorder %s27, 0
      %p54 = por %p52, %p53
      %s56 = sadd.s32 %s55, 1
      %p59 = scmp.eq.s32.totalorder %s21, 1
      %p60 = scmp.ne.s32.totalorder %s55, %s57
      %p61 = scmp.eq.s32.totalorder %s21, 0
      %p62 = por %p60, %p61
      %p63 = scmp.ne.s32.totalorder %s55, %s57
      %p64 = scmp.eq.s32.totalorder %s26, 1
      %p65 = por %p63, %p64
      %p66 = scmp.ne.s32.totalorder %s57, %s58
      %p67 = scmp.eq.s32.totalorder %s26, 0
      %p68 = por %p66, %p67
      %p69 = scmp.ne.s32.totalorder %s57, %s58
      %p70 = scmp.eq.s32.totalorder %s27, 1
      %p71 = por %p69, %p70
      %p73 = scmp.ne.s32.totalorder %s58, %s72
      %p74 = scmp.eq.s32.totalorder %s27, 0
      %p75 = por %p73, %p74
      %s77 = sadd.s32 %s76, 1
      %p80 = scmp.eq.s32.totalorder %s21, 1
      %p81 = scmp.ne.s32.totalorder %s76, %s78
      %p82 = scmp.eq.s32.totalorder %s21, 0
      %p83 = por %p81, %p82
      %p84 = scmp.ne.s32.totalorder %s76, %s78
      %p85 = scmp.eq.s32.totalorder %s26, 1
      %p86 = por %p84, %p85
      %p87 = scmp.ne.s32.totalorder %s78, %s79
      %p88 = scmp.eq.s32.totalorder %s26, 0
      %p89 = por %p87, %p88
      %p90 = scmp.ne.s32.totalorder %s78, %s79
      %p91 = scmp.eq.s32.totalorder %s27, 1
      %p92 = por %p90, %p91
      %p94 = scmp.ne.s32.totalorder %s79, %s93
      %p95 = scmp.eq.s32.totalorder %s27, 0
      %p96 = por %p94, %p95
      %s98 = sadd.s32 %s97, 1
      %p101 = scmp.eq.s32.totalorder %s21, 1
      %p102 = scmp.ne.s32.totalorder %s97, %s99
      %p103 = scmp.eq.s32.totalorder %s21, 0
      %p104 = por %p102, %p103
      %p105 = scmp.ne.s32.totalorder %s97, %s99
      %p106 = scmp.eq.s32.totalorder %s26, 1
      %p107 = por %p105, %p106
      %p108 = scmp.ne.s32.totalorder %s99, %s100
      %p109 = scmp.eq.s32.totalorder %s26, 0
      %p110 = por %p108, %p109
      %p111 = scmp.ne.s32.totalorder %s99, %s100
      %p112 = scmp.eq.s32.totalorder %s27, 1
      %p113 = por %p111, %p112
      %p115 = scmp.ne.s32.totalorder %s100, %s114
      %p116 = scmp.eq.s32.totalorder %s27, 0
      %p117 = por %p115, %p116
      %s119 = sadd.s32 %s118, 1
      %p122 = scmp.eq.s32.totalorder %s21, 1
      %p123 = scmp.ne.s32.totalorder %s118, %s120
      %p124 = scmp.eq.s32.totalorder %s21, 0
      %p125 = por %p123, %p124
      %p126 = scmp.ne.s32.totalorder %s118, %s120
      %p127 = scmp.eq.s32.totalorder %s26, 1
      %p128 = por %p126, %p127
      %p129 = scmp.ne.s32.totalorder %s120, %s121
      %p130 = scmp.eq.s32.totalorder %s26, 0
      %p131 = por %p129, %p130
      %p132 = scmp.ne.s32.totalorder %s120, %s121
      %p133 = scmp.eq.s32.totalorder %s27, 1
      %p134 = por %p132, %p133
      %p136 = scmp.ne.s32.totalorder %s121, %s135
      %p137 = scmp.eq.s32.totalorder %s27, 0
      %p138 = por %p136, %p137
      %s140 = sadd.s32 %s139, 1
      %p143 = scmp.eq.s32.totalorder %s21, 1
      %p144 = scmp.ne.s32.totalorder %s139, %s141
      %p145 = scmp.eq.s32.totalorder %s21, 0
      %p146 = por %p144, %p145
      %p147 = scmp.ne.s32.totalorder %s139, %s141
      %p148 = scmp.eq.s32.totalorder %s26, 1
      %p149 = por %p147, %p148
      %p150 = scmp.ne.s32.totalorder %s141, %s142
      %p151 = scmp.eq.s32.totalorder %s26, 0
      %p152 = por %p150, %p151
      %p153 = scmp.ne.s32.totalorder %s141, %s142
      %p154 = scmp.eq.s32.totalorder %s27, 1
      %p155 = por %p153, %p154
      %p157 = scmp.ne.s32.totalorder %s142, %s156
      %p158 = scmp.eq.s32.totalorder %s27, 0
      %p159 = por %p157, %p158
      %s161 = sadd.s32 %s160, 1
      %p164 = scmp.eq.s32.totalorder %s21, 1
      %p165 = scmp.ne.s32.totalorder %s160, %s162
      %p166 = scmp.eq.s32.totalorder %s21, 0
      %p167 = por %p165, %p166
      %p168 = scmp.ne.s32.totalorder %s160, %s162
      %p169 = scmp.eq.s32.totalorder %s26, 1
      %p170 = por %p168, %p169
      %p171 = scmp.ne.s32.totalorder %s162, %s163
      %p172 = scmp.eq.s32.totalorder %s26, 0
      %p173 = por %p171, %p172
      %p174 = scmp.ne.s32.totalorder %s162, %s163
      %p175 = scmp.eq.s32.totalorder %s27, 1
      %p176 = por %p174, %p175
      %p178 = scmp.ne.s32.totalorder %s163, %s177
      %p179 = scmp.eq.s32.totalorder %s27, 0
      %p180 = por %p178, %p179
      %s181 = ssub.s32 %s21, %s28
      %p182 = scmp.eq.s32.totalorder %s181, 0
      %s184 = sadd.s32 %s183, 1
      %s185 = scalar_select %p182, %s183, %s184
      %p188 = pneg %p182
      %p189 = scmp.eq.s32.totalorder %s21, 1
      %p190 = por %p188, %p189
      %p191 = scmp.ne.s32.totalorder %s183, %s186
      %p192 = scmp.eq.s32.totalorder %s21, 0
      %p193 = por %p191, %p192
      %p194 = scmp.ne.s32.totalorder %s183, %s186
      %p195 = scmp.eq.s32.totalorder %s26, 1
      %p196 = por %p194, %p195
      %p197 = scmp.ne.s32.totalorder %s186, %s187
      %p198 = scmp.eq.s32.totalorder %s26, 0
      %p199 = por %p197, %p198
      %p200 = scmp.ne.s32.totalorder %s186, %s187
      %p201 = scmp.eq.s32.totalorder %s27, 1
      %p202 = por %p200, %p201
      %p204 = scmp.ne.s32.totalorder %s187, %s203
      %p205 = scmp.eq.s32.totalorder %s27, 0
      %p206 = por %p204, %p205
      %p207 = scmp.le.s32.totalorder 1, %s21
      %p208 = scmp.lt.s32.totalorder %s21, 3
      %p209 = pnand %p207, %p208
      %p210 = pneg %p209
      // Predicated region
      $region9: #{tpu_custom_call.1} parent=5 // pred_check
        _
      $region10: #{tpu_custom_call.1} parent=5 // pred_check_branch
        %212 = sbr.rel (%p209) target = $region12
      $region11: #{tpu_custom_call.1} parent=5 // pred_region
        %s213 = ssub.s32 %s21, 1
        // Predicated region
        $region13: #{tpu_custom_call.1} parent=11 // pred_check
          %p214 = pneg %p68
        $region14: #{tpu_custom_call.1} parent=11 // pred_check_branch
          %216 = sbr.rel (%p214) target = $region16
        $region15: #{tpu_custom_call.1} parent=11 // pred_region
          %218 = vsyncadd [#allocation6], 0
          %s219 = sshll.u32 %s1, 4
          %s220 = int_to_ptr.hbm [resolvable:$true] %s219
          %s221 = sshll.u32 [#allocation5], 4
          %s222 = int_to_ptr.vmem [resolvable:$true] %s221
          %227 = dma.hbm_to_vmem [thread:$0]  %s220, 8192, %s222, [#allocation6], 512, 512, 32
        $region16: #{tpu_custom_call.1} parent=11 // pred_fallthru
          _
        // Predicated region
        $region17: #{tpu_custom_call.1} parent=11 // pred_check
          %p228 = pneg %p89
        $region18: #{tpu_custom_call.1} parent=11 // pred_check_branch
          %230 = sbr.rel (%p228) target = $region20
        $region19: #{tpu_custom_call.1} parent=11 // pred_region
          %232 = vsyncadd [#allocation6], 0
          %s234 = sshll.u32 %s2, 4
          %s235 = int_to_ptr.hbm [resolvable:$true] %s234
          %s236 = sshll.u32 [#allocation7], 4
          %s237 = int_to_ptr.vmem [resolvable:$true] %s236
          %239 = dma.hbm_to_vmem [thread:$0]  %s235, 64, %s237, [#allocation6]
        $region20: #{tpu_custom_call.1} parent=11 // pred_fallthru
          _
        // Predicated region
        $region21: #{tpu_custom_call.1} parent=11 // pred_check
          %p240 = pneg %p110
        $region22: #{tpu_custom_call.1} parent=11 // pred_check_branch
          %242 = sbr.rel (%p240) target = $region24
        $region23: #{tpu_custom_call.1} parent=11 // pred_region
          %244 = vsyncadd [#allocation9], 0
          %s245 = sshll.u32 %s3, 4
          %s246 = int_to_ptr.hbm [resolvable:$true] %s245
          %s247 = sshll.u32 [#allocation8], 4
          %s248 = int_to_ptr.vmem [resolvable:$true] %s247
          %253 = dma.hbm_to_vmem [thread:$0]  %s246, 16384, %s248, [#allocation9], 256, 256, 16
        $region24: #{tpu_custom_call.1} parent=11 // pred_fallthru
          _
        // Predicated region
        $region25: #{tpu_custom_call.1} parent=11 // pred_check
          %p254 = pneg %p131
        $region26: #{tpu_custom_call.1} parent=11 // pred_check_branch
          %256 = sbr.rel (%p254) target = $region28
        $region27: #{tpu_custom_call.1} parent=11 // pred_region
          _
        $region28: #{tpu_custom_call.1} parent=11 // pred_fallthru
          _
        // Predicated region
        $region29: #{tpu_custom_call.1} parent=11 // pred_check
          %p257 = pneg %p152
        $region30: #{tpu_custom_call.1} parent=11 // pred_check_branch
          %259 = sbr.rel (%p257) target = $region32
        $region31: #{tpu_custom_call.1} parent=11 // pred_region
          %261 = vsyncadd [#allocation9], 0
          %s262 = sshll.u32 %s5, 4
          %s263 = int_to_ptr.hbm [resolvable:$true] %s262
          %s264 = sshll.u32 [#allocation10], 4
          %s265 = int_to_ptr.vmem [resolvable:$true] %s264
          %270 = dma.hbm_to_vmem [thread:$0]  %s263, 4096, %s265, [#allocation9], 128, 128, 8
        $region32: #{tpu_custom_call.1} parent=11 // pred_fallthru
          _
        // Predicated region
        $region33: #{tpu_custom_call.1} parent=11 // pred_check
          %p271 = pneg %p173
        $region34: #{tpu_custom_call.1} parent=11 // pred_check_branch
          %273 = sbr.rel (%p271) target = $region36
        $region35: #{tpu_custom_call.1} parent=11 // pred_region
          _
        $region36: #{tpu_custom_call.1} parent=11 // pred_fallthru
          _
      $region12: #{tpu_custom_call.1} parent=5 // pred_fallthru
        _
      %p274 = scmp.lt.s32.totalorder %s21, 2
      // Predicated region
      $region37: #{tpu_custom_call.1} parent=5 // pred_check
        %p275 = pneg %p274
      $region38: #{tpu_custom_call.1} parent=5 // pred_check_branch
        %277 = sbr.rel (%p275) target = $region40
      $region39: #{tpu_custom_call.1} parent=5 // pred_region
        // Predicated region
        $region41: #{tpu_custom_call.1} parent=39 // pred_check
          %p278 = pneg %p41
        $region42: #{tpu_custom_call.1} parent=39 // pred_check_branch
          %280 = sbr.rel (%p278) target = $region44
        $region43: #{tpu_custom_call.1} parent=39 // pred_region
          %s281 = sand.u32 %s31, 1
          %s282 = scalar_lea.sflag [#allocation3], %s281
          %s283 = sand.u32 %s31, 1
          %s284 = smul.addr %s283, 16
          %s285 = scalar_lea.vmem [#allocation2], %s284
          %s286 = smul.u32 2, %s21
          %288 = vsyncadd %s282, 0
          %s289 = smul.addr %s286, 8
          %s290 = scalar_lea.hbm %s0, %s289
          %s291 = sshll.u32 %s290, 4
          %s292 = int_to_ptr.hbm [resolvable:$true] %s291
          %s293 = sshll.u32 %s285, 4
          %s294 = int_to_ptr.vmem [resolvable:$true] %s293
          %299 = dma.hbm_to_vmem [thread:$0]  %s292, 256, %s294, %s282, 128, 128, 8
        $region44: #{tpu_custom_call.1} parent=39 // pred_fallthru
          _
      $region40: #{tpu_custom_call.1} parent=5 // pred_fallthru
        _
      %p300 = scmp.le.s32.totalorder 1, %s21
      %p301 = scmp.lt.s32.totalorder %s21, 3
      %p302 = pnand %p300, %p301
      %p303 = pneg %p302
      // Predicated region
      $region45: #{tpu_custom_call.1} parent=5 // pred_check
        _
      $region46: #{tpu_custom_call.1} parent=5 // pred_check_branch
        %305 = sbr.rel (%p302) target = $region48
      $region47: #{tpu_custom_call.1} parent=5 // pred_region
        %s306 = ssub.s32 %s21, 1
        %s307 = sand.u32 %s34, 1
        %s308 = scalar_lea.sflag [#allocation3], %s307
        %s309 = sand.u32 %s34, 1
        %s310 = smul.addr %s309, 16
        %s311 = scalar_lea.vmem [#allocation2], %s310
        // Predicated region
        $region49: #{tpu_custom_call.1} parent=47 // pred_check
          %p312 = pneg %p47
        $region50: #{tpu_custom_call.1} parent=47 // pred_check_branch
          %314 = sbr.rel (%p312) target = $region52
        $region51: #{tpu_custom_call.1} parent=47 // pred_region
          %316 = dma.done %s308, 256
        $region52: #{tpu_custom_call.1} parent=47 // pred_fallthru
          _
        // Predicated region
        $region53: #{tpu_custom_call.1} parent=47 // pred_check
          %p317 = pneg %p68
        $region54: #{tpu_custom_call.1} parent=47 // pred_check_branch
          %319 = sbr.rel (%p317) target = $region56
        $region55: #{tpu_custom_call.1} parent=47 // pred_region
          %321 = dma.done [#allocation6], 8192
        $region56: #{tpu_custom_call.1} parent=47 // pred_fallthru
          _
        // Predicated region
        $region57: #{tpu_custom_call.1} parent=47 // pred_check
          %p322 = pneg %p89
        $region58: #{tpu_custom_call.1} parent=47 // pred_check_branch
          %324 = sbr.rel (%p322) target = $region60
        $region59: #{tpu_custom_call.1} parent=47 // pred_region
          %326 = dma.done [#allocation6], 64
        $region60: #{tpu_custom_call.1} parent=47 // pred_fallthru
          _
        // Predicated region
        $region61: #{tpu_custom_call.1} parent=47 // pred_check
          %p327 = pneg %p110
        $region62: #{tpu_custom_call.1} parent=47 // pred_check_branch
          %329 = sbr.rel (%p327) target = $region64
        $region63: #{tpu_custom_call.1} parent=47 // pred_region
          %331 = dma.done [#allocation9], 16384
        $region64: #{tpu_custom_call.1} parent=47 // pred_fallthru
          _
        // Predicated region
        $region65: #{tpu_custom_call.1} parent=47 // pred_check
          %p332 = pneg %p152
        $region66: #{tpu_custom_call.1} parent=47 // pred_check_branch
          %334 = sbr.rel (%p332) target = $region68
        $region67: #{tpu_custom_call.1} parent=47 // pred_region
          %336 = dma.done [#allocation9], 4096
        $region68: #{tpu_custom_call.1} parent=47 // pred_fallthru
          _
        %s337 = sand.u32 %s34, 1
        %s338 = scalar_lea.sflag [#allocation3], %s337
        %s339 = sand.u32 %s34, 1
        %s340 = smul.addr %s339, 16
        %s341 = scalar_lea.vmem [#allocation2], %s340
        %p342 = pneg %p47
        %p343 = pneg %p44
        %p344 = pneg %p68
        %p345 = pneg %p65
        %p346 = pneg %p89
        %p347 = pneg %p86
        %p348 = pneg %p110
        %p349 = pneg %p107
        %p350 = pneg %p131
        %p351 = pneg %p128
        %p352 = pneg %p152
        %p353 = pneg %p149
        %p354 = pneg %p173
        %p355 = pneg %p170
        %p356 = pneg %p199
        %p357 = pneg %p196
        %s358 = sand.u32 %s186, 1
        %s359 = scalar_lea.sflag [#allocation4], %s358
        %s360 = sand.u32 %s186, 1
        %s361 = smul.addr %s360, 16
        %s362 = scalar_lea.vmem [#allocation11], %s361
        %s363 = smul.u32 2, %s26
        %s364 = smul.u32 2, %s26
        %v365 = vld [vmem:[%s311] sm:$0xff]
        %v366 = vld [vmem:[%s311 + $0x8] sm:$0xff]
        %v367 = vld [vmem:[#allocation5] sm:$0xff]
        %v368 = vld [vmem:[#allocation5 + $0x8] sm:$0xff]
        %v369 = vld [vmem:[#allocation5 + $0x10] sm:$0xff]
        %v370 = vld [vmem:[#allocation5 + $0x18] sm:$0xff]
        %v371 = vld [vmem:[#allocation5 + $0x20] sm:$0xff]
        %v372 = vld [vmem:[#allocation5 + $0x28] sm:$0xff]
        %v373 = vld [vmem:[#allocation5 + $0x30] sm:$0xff]
        %v374 = vld [vmem:[#allocation5 + $0x38] sm:$0xff]
        %v375 = vld [vmem:[#allocation5 + $0x40] sm:$0xff]
        %v376 = vld [vmem:[#allocation5 + $0x48] sm:$0xff]
        %v377 = vld [vmem:[#allocation5 + $0x50] sm:$0xff]
        %v378 = vld [vmem:[#allocation5 + $0x58] sm:$0xff]
        %v379 = vld [vmem:[#allocation5 + $0x60] sm:$0xff]
        %v380 = vld [vmem:[#allocation5 + $0x68] sm:$0xff]
        %v381 = vld [vmem:[#allocation5 + $0x70] sm:$0xff]
        %v382 = vld [vmem:[#allocation5 + $0x78] sm:$0xff]
        %v383 = vld [vmem:[#allocation5 + $0x80] sm:$0xff]
        %v384 = vld [vmem:[#allocation5 + $0x88] sm:$0xff]
        %v385 = vld [vmem:[#allocation5 + $0x90] sm:$0xff]
        %v386 = vld [vmem:[#allocation5 + $0x98] sm:$0xff]
        %v387 = vld [vmem:[#allocation5 + $0xa0] sm:$0xff]
        %v388 = vld [vmem:[#allocation5 + $0xa8] sm:$0xff]
        %v389 = vld [vmem:[#allocation5 + $0xb0] sm:$0xff]
        %v390 = vld [vmem:[#allocation5 + $0xb8] sm:$0xff]
        %v391 = vld [vmem:[#allocation5 + $0xc0] sm:$0xff]
        %v392 = vld [vmem:[#allocation5 + $0xc8] sm:$0xff]
        %v393 = vld [vmem:[#allocation5 + $0xd0] sm:$0xff]
        %v394 = vld [vmem:[#allocation5 + $0xd8] sm:$0xff]
        %v395 = vld [vmem:[#allocation5 + $0xe0] sm:$0xff]
        %v396 = vld [vmem:[#allocation5 + $0xe8] sm:$0xff]
        %v397 = vld [vmem:[#allocation5 + $0xf0] sm:$0xff]
        %v398 = vld [vmem:[#allocation5 + $0xf8] sm:$0xff]
        %v399 = vld [vmem:[#allocation5 + $0x100] sm:$0xff]
        %v400 = vld [vmem:[#allocation5 + $0x108] sm:$0xff]
        %v401 = vld [vmem:[#allocation5 + $0x110] sm:$0xff]
        %v402 = vld [vmem:[#allocation5 + $0x118] sm:$0xff]
        %v403 = vld [vmem:[#allocation5 + $0x120] sm:$0xff]
        %v404 = vld [vmem:[#allocation5 + $0x128] sm:$0xff]
        %v405 = vld [vmem:[#allocation5 + $0x130] sm:$0xff]
        %v406 = vld [vmem:[#allocation5 + $0x138] sm:$0xff]
        %v407 = vld [vmem:[#allocation5 + $0x140] sm:$0xff]
        %v408 = vld [vmem:[#allocation5 + $0x148] sm:$0xff]
        %v409 = vld [vmem:[#allocation5 + $0x150] sm:$0xff]
        %v410 = vld [vmem:[#allocation5 + $0x158] sm:$0xff]
        %v411 = vld [vmem:[#allocation5 + $0x160] sm:$0xff]
        %v412 = vld [vmem:[#allocation5 + $0x168] sm:$0xff]
        %v413 = vld [vmem:[#allocation5 + $0x170] sm:$0xff]
        %v414 = vld [vmem:[#allocation5 + $0x178] sm:$0xff]
        %v415 = vld [vmem:[#allocation5 + $0x180] sm:$0xff]
        %v416 = vld [vmem:[#allocation5 + $0x188] sm:$0xff]
        %v417 = vld [vmem:[#allocation5 + $0x190] sm:$0xff]
        %v418 = vld [vmem:[#allocation5 + $0x198] sm:$0xff]
        %v419 = vld [vmem:[#allocation5 + $0x1a0] sm:$0xff]
        %v420 = vld [vmem:[#allocation5 + $0x1a8] sm:$0xff]
        %v421 = vld [vmem:[#allocation5 + $0x1b0] sm:$0xff]
        %v422 = vld [vmem:[#allocation5 + $0x1b8] sm:$0xff]
        %v423 = vld [vmem:[#allocation5 + $0x1c0] sm:$0xff]
        %v424 = vld [vmem:[#allocation5 + $0x1c8] sm:$0xff]
        %v425 = vld [vmem:[#allocation5 + $0x1d0] sm:$0xff]
        %v426 = vld [vmem:[#allocation5 + $0x1d8] sm:$0xff]
        %v427 = vld [vmem:[#allocation5 + $0x1e0] sm:$0xff]
        %v428 = vld [vmem:[#allocation5 + $0x1e8] sm:$0xff]
        %v429 = vld [vmem:[#allocation5 + $0x1f0] sm:$0xff]
        %v430 = vld [vmem:[#allocation5 + $0x1f8] sm:$0xff]
        %v431 = vld [vmem:[#allocation7] sm:$0xf]
        %v433 = vperm.slane %v431, 0
        %v434 = vperm.slane %v431, 1
        %v435 = vperm.slane %v431, 2
        %v436 = vperm.slane %v431, 3
        %441 = vmatpush.msra.mxu0 %v427
        %442 = vmatpush.msra.mxu0 %v423
        %443 = vmatpush.msra.mxu0 %v419
        %444 = vmatpush.msra.mxu0 %v415
        %445 = vmatpush.msra.mxu0 %v411
        %446 = vmatpush.msra.mxu0 %v407
        %447 = vmatpush.msra.mxu0 %v403
        %448 = vmatpush.msra.mxu0 %v399
        %449 = vmatpush.msra.mxu0 %v395
        %450 = vmatpush.msra.mxu0 %v391
        %451 = vmatpush.msra.mxu0 %v387
        %452 = vmatpush.msra.mxu0 %v383
        %453 = vmatpush.msra.mxu0 %v379
        %454 = vmatpush.msra.mxu0 %v375
        %455 = vmatpush.msra.mxu0 %v371
        %456 = vmatpush.msra.mxu0 %v367
        %457 = vmatmul.f32.gmra.mxu0 %v365
        %v458 = vpop.f32.mrf.mxu0
        %v459 = vadd.f32 %v433, %v458
        %460 = vmatmul.f32.gmra.mxu0 %v366
        %v461 = vpop.f32.mrf.mxu0
        %v462 = vadd.f32 %v433, %v461
        %463 = vdwg.mxu0
        %464 = vmatpush.msra.mxu0 %v428
        %465 = vmatpush.msra.mxu0 %v424
        %466 = vmatpush.msra.mxu0 %v420
        %467 = vmatpush.msra.mxu0 %v416
        %468 = vmatpush.msra.mxu0 %v412
        %469 = vmatpush.msra.mxu0 %v408
        %470 = vmatpush.msra.mxu0 %v404
        %471 = vmatpush.msra.mxu0 %v400
        %472 = vmatpush.msra.mxu0 %v396
        %473 = vmatpush.msra.mxu0 %v392
        %474 = vmatpush.msra.mxu0 %v388
        %475 = vmatpush.msra.mxu0 %v384
        %476 = vmatpush.msra.mxu0 %v380
        %477 = vmatpush.msra.mxu0 %v376
        %478 = vmatpush.msra.mxu0 %v372
        %479 = vmatpush.msra.mxu0 %v368
        %480 = vmatmul.f32.gmra.mxu0 %v365
        %v481 = vpop.f32.mrf.mxu0
        %v482 = vadd.f32 %v434, %v481
        %483 = vmatmul.f32.gmra.mxu0 %v366
        %v484 = vpop.f32.mrf.mxu0
        %v485 = vadd.f32 %v434, %v484
        %486 = vdwg.mxu0
        %487 = vmatpush.msra.mxu0 %v429
        %488 = vmatpush.msra.mxu0 %v425
        %489 = vmatpush.msra.mxu0 %v421
        %490 = vmatpush.msra.mxu0 %v417
        %491 = vmatpush.msra.mxu0 %v413
        %492 = vmatpush.msra.mxu0 %v409
        %493 = vmatpush.msra.mxu0 %v405
        %494 = vmatpush.msra.mxu0 %v401
        %495 = vmatpush.msra.mxu0 %v397
        %496 = vmatpush.msra.mxu0 %v393
        %497 = vmatpush.msra.mxu0 %v389
        %498 = vmatpush.msra.mxu0 %v385
        %499 = vmatpush.msra.mxu0 %v381
        %500 = vmatpush.msra.mxu0 %v377
        %501 = vmatpush.msra.mxu0 %v373
        %502 = vmatpush.msra.mxu0 %v369
        %503 = vmatmul.f32.gmra.mxu0 %v365
        %v504 = vpop.f32.mrf.mxu0
        %v505 = vadd.f32 %v435, %v504
        %506 = vmatmul.f32.gmra.mxu0 %v366
        %v507 = vpop.f32.mrf.mxu0
        %v508 = vadd.f32 %v435, %v507
        %509 = vdwg.mxu0
        %510 = vmatpush.msra.mxu0 %v430
        %511 = vmatpush.msra.mxu0 %v426
        %512 = vmatpush.msra.mxu0 %v422
        %513 = vmatpush.msra.mxu0 %v418
        %514 = vmatpush.msra.mxu0 %v414
        %515 = vmatpush.msra.mxu0 %v410
        %516 = vmatpush.msra.mxu0 %v406
        %517 = vmatpush.msra.mxu0 %v402
        %518 = vmatpush.msra.mxu0 %v398
        %519 = vmatpush.msra.mxu0 %v394
        %520 = vmatpush.msra.mxu0 %v390
        %521 = vmatpush.msra.mxu0 %v386
        %522 = vmatpush.msra.mxu0 %v382
        %523 = vmatpush.msra.mxu0 %v378
        %524 = vmatpush.msra.mxu0 %v374
        %525 = vmatpush.msra.mxu0 %v370
        %526 = vmatmul.f32.gmra.mxu0 %v365
        %v527 = vpop.f32.mrf.mxu0
        %v528 = vadd.f32 %v436, %v527
        %529 = vmatmul.f32.gmra.mxu0 %v366
        %v530 = vpop.f32.mrf.mxu0
        %v531 = vadd.f32 %v436, %v530
        %532 = vdwg.mxu0
        %v533 = vmax.f32 %v459, 0.0
        %v534 = vmax.f32 %v482, 0.0
        %v535 = vmax.f32 %v505, 0.0
        %v536 = vmax.f32 %v528, 0.0
        %v537 = vmax.f32 %v462, 0.0
        %v538 = vmax.f32 %v485, 0.0
        %v539 = vmax.f32 %v508, 0.0
        %v540 = vmax.f32 %v531, 0.0
        %v541 = vld [vmem:[#allocation8] sm:$0xff]
        %v542 = vld [vmem:[#allocation8 + $0x8] sm:$0xff]
        %v543 = vld [vmem:[#allocation8 + $0x10] sm:$0xff]
        %v544 = vld [vmem:[#allocation8 + $0x18] sm:$0xff]
        %v545 = vld [vmem:[#allocation8 + $0x20] sm:$0xff]
        %v546 = vld [vmem:[#allocation8 + $0x28] sm:$0xff]
        %v547 = vld [vmem:[#allocation8 + $0x30] sm:$0xff]
        %v548 = vld [vmem:[#allocation8 + $0x38] sm:$0xff]
        %v549 = vld [vmem:[#allocation8 + $0x40] sm:$0xff]
        %v550 = vld [vmem:[#allocation8 + $0x48] sm:$0xff]
        %v551 = vld [vmem:[#allocation8 + $0x50] sm:$0xff]
        %v552 = vld [vmem:[#allocation8 + $0x58] sm:$0xff]
        %v553 = vld [vmem:[#allocation8 + $0x60] sm:$0xff]
        %v554 = vld [vmem:[#allocation8 + $0x68] sm:$0xff]
        %v555 = vld [vmem:[#allocation8 + $0x70] sm:$0xff]
        %v556 = vld [vmem:[#allocation8 + $0x78] sm:$0xff]
        %v557 = vld [vmem:[#allocation8 + $0x80] sm:$0xff]
        %v558 = vld [vmem:[#allocation8 + $0x88] sm:$0xff]
        %v559 = vld [vmem:[#allocation8 + $0x90] sm:$0xff]
        %v560 = vld [vmem:[#allocation8 + $0x98] sm:$0xff]
        %v561 = vld [vmem:[#allocation8 + $0xa0] sm:$0xff]
        %v562 = vld [vmem:[#allocation8 + $0xa8] sm:$0xff]
        %v563 = vld [vmem:[#allocation8 + $0xb0] sm:$0xff]
        %v564 = vld [vmem:[#allocation8 + $0xb8] sm:$0xff]
        %v565 = vld [vmem:[#allocation8 + $0xc0] sm:$0xff]
        %v566 = vld [vmem:[#allocation8 + $0xc8] sm:$0xff]
        %v567 = vld [vmem:[#allocation8 + $0xd0] sm:$0xff]
        %v568 = vld [vmem:[#allocation8 + $0xd8] sm:$0xff]
        %v569 = vld [vmem:[#allocation8 + $0xe0] sm:$0xff]
        %v570 = vld [vmem:[#allocation8 + $0xe8] sm:$0xff]
        %v571 = vld [vmem:[#allocation8 + $0xf0] sm:$0xff]
        %v572 = vld [vmem:[#allocation8 + $0xf8] sm:$0xff]
        %v573 = vld [vmem:[#allocation8 + $0x100] sm:$0xff]
        %v574 = vld [vmem:[#allocation8 + $0x108] sm:$0xff]
        %v575 = vld [vmem:[#allocation8 + $0x110] sm:$0xff]
        %v576 = vld [vmem:[#allocation8 + $0x118] sm:$0xff]
        %v577 = vld [vmem:[#allocation8 + $0x120] sm:$0xff]
        %v578 = vld [vmem:[#allocation8 + $0x128] sm:$0xff]
        %v579 = vld [vmem:[#allocation8 + $0x130] sm:$0xff]
        %v580 = vld [vmem:[#allocation8 + $0x138] sm:$0xff]
        %v581 = vld [vmem:[#allocation8 + $0x140] sm:$0xff]
        %v582 = vld [vmem:[#allocation8 + $0x148] sm:$0xff]
        %v583 = vld [vmem:[#allocation8 + $0x150] sm:$0xff]
        %v584 = vld [vmem:[#allocation8 + $0x158] sm:$0xff]
        %v585 = vld [vmem:[#allocation8 + $0x160] sm:$0xff]
        %v586 = vld [vmem:[#allocation8 + $0x168] sm:$0xff]
        %v587 = vld [vmem:[#allocation8 + $0x170] sm:$0xff]
        %v588 = vld [vmem:[#allocation8 + $0x178] sm:$0xff]
        %v589 = vld [vmem:[#allocation8 + $0x180] sm:$0xff]
        %v590 = vld [vmem:[#allocation8 + $0x188] sm:$0xff]
        %v591 = vld [vmem:[#allocation8 + $0x190] sm:$0xff]
        %v592 = vld [vmem:[#allocation8 + $0x198] sm:$0xff]
        %v593 = vld [vmem:[#allocation8 + $0x1a0] sm:$0xff]
        %v594 = vld [vmem:[#allocation8 + $0x1a8] sm:$0xff]
        %v595 = vld [vmem:[#allocation8 + $0x1b0] sm:$0xff]
        %v596 = vld [vmem:[#allocation8 + $0x1b8] sm:$0xff]
        %v597 = vld [vmem:[#allocation8 + $0x1c0] sm:$0xff]
        %v598 = vld [vmem:[#allocation8 + $0x1c8] sm:$0xff]
        %v599 = vld [vmem:[#allocation8 + $0x1d0] sm:$0xff]
        %v600 = vld [vmem:[#allocation8 + $0x1d8] sm:$0xff]
        %v601 = vld [vmem:[#allocation8 + $0x1e0] sm:$0xff]
        %v602 = vld [vmem:[#allocation8 + $0x1e8] sm:$0xff]
        %v603 = vld [vmem:[#allocation8 + $0x1f0] sm:$0xff]
        %v604 = vld [vmem:[#allocation8 + $0x1f8] sm:$0xff]
        %v605 = vld [vmem:[#allocation8 + $0x200] sm:$0xff]
        %v606 = vld [vmem:[#allocation8 + $0x208] sm:$0xff]
        %v607 = vld [vmem:[#allocation8 + $0x210] sm:$0xff]
        %v608 = vld [vmem:[#allocation8 + $0x218] sm:$0xff]
        %v609 = vld [vmem:[#allocation8 + $0x220] sm:$0xff]
        %v610 = vld [vmem:[#allocation8 + $0x228] sm:$0xff]
        %v611 = vld [vmem:[#allocation8 + $0x230] sm:$0xff]
        %v612 = vld [vmem:[#allocation8 + $0x238] sm:$0xff]
        %v613 = vld [vmem:[#allocation8 + $0x240] sm:$0xff]
        %v614 = vld [vmem:[#allocation8 + $0x248] sm:$0xff]
        %v615 = vld [vmem:[#allocation8 + $0x250] sm:$0xff]
        %v616 = vld [vmem:[#allocation8 + $0x258] sm:$0xff]
        %v617 = vld [vmem:[#allocation8 + $0x260] sm:$0xff]
        %v618 = vld [vmem:[#allocation8 + $0x268] sm:$0xff]
        %v619 = vld [vmem:[#allocation8 + $0x270] sm:$0xff]
        %v620 = vld [vmem:[#allocation8 + $0x278] sm:$0xff]
        %v621 = vld [vmem:[#allocation8 + $0x280] sm:$0xff]
        %v622 = vld [vmem:[#allocation8 + $0x288] sm:$0xff]
        %v623 = vld [vmem:[#allocation8 + $0x290] sm:$0xff]
        %v624 = vld [vmem:[#allocation8 + $0x298] sm:$0xff]
        %v625 = vld [vmem:[#allocation8 + $0x2a0] sm:$0xff]
        %v626 = vld [vmem:[#allocation8 + $0x2a8] sm:$0xff]
        %v627 = vld [vmem:[#allocation8 + $0x2b0] sm:$0xff]
        %v628 = vld [vmem:[#allocation8 + $0x2b8] sm:$0xff]
        %v629 = vld [vmem:[#allocation8 + $0x2c0] sm:$0xff]
        %v630 = vld [vmem:[#allocation8 + $0x2c8] sm:$0xff]
        %v631 = vld [vmem:[#allocation8 + $0x2d0] sm:$0xff]
        %v632 = vld [vmem:[#allocation8 + $0x2d8] sm:$0xff]
        %v633 = vld [vmem:[#allocation8 + $0x2e0] sm:$0xff]
        %v634 = vld [vmem:[#allocation8 + $0x2e8] sm:$0xff]
        %v635 = vld [vmem:[#allocation8 + $0x2f0] sm:$0xff]
        %v636 = vld [vmem:[#allocation8 + $0x2f8] sm:$0xff]
        %v637 = vld [vmem:[#allocation8 + $0x300] sm:$0xff]
        %v638 = vld [vmem:[#allocation8 + $0x308] sm:$0xff]
        %v639 = vld [vmem:[#allocation8 + $0x310] sm:$0xff]
        %v640 = vld [vmem:[#allocation8 + $0x318] sm:$0xff]
        %v641 = vld [vmem:[#allocation8 + $0x320] sm:$0xff]
        %v642 = vld [vmem:[#allocation8 + $0x328] sm:$0xff]
        %v643 = vld [vmem:[#allocation8 + $0x330] sm:$0xff]
        %v644 = vld [vmem:[#allocation8 + $0x338] sm:$0xff]
        %v645 = vld [vmem:[#allocation8 + $0x340] sm:$0xff]
        %v646 = vld [vmem:[#allocation8 + $0x348] sm:$0xff]
        %v647 = vld [vmem:[#allocation8 + $0x350] sm:$0xff]
        %v648 = vld [vmem:[#allocation8 + $0x358] sm:$0xff]
        %v649 = vld [vmem:[#allocation8 + $0x360] sm:$0xff]
        %v650 = vld [vmem:[#allocation8 + $0x368] sm:$0xff]
        %v651 = vld [vmem:[#allocation8 + $0x370] sm:$0xff]
        %v652 = vld [vmem:[#allocation8 + $0x378] sm:$0xff]
        %v653 = vld [vmem:[#allocation8 + $0x380] sm:$0xff]
        %v654 = vld [vmem:[#allocation8 + $0x388] sm:$0xff]
        %v655 = vld [vmem:[#allocation8 + $0x390] sm:$0xff]
        %v656 = vld [vmem:[#allocation8 + $0x398] sm:$0xff]
        %v657 = vld [vmem:[#allocation8 + $0x3a0] sm:$0xff]
        %v658 = vld [vmem:[#allocation8 + $0x3a8] sm:$0xff]
        %v659 = vld [vmem:[#allocation8 + $0x3b0] sm:$0xff]
        %v660 = vld [vmem:[#allocation8 + $0x3b8] sm:$0xff]
        %v661 = vld [vmem:[#allocation8 + $0x3c0] sm:$0xff]
        %v662 = vld [vmem:[#allocation8 + $0x3c8] sm:$0xff]
        %v663 = vld [vmem:[#allocation8 + $0x3d0] sm:$0xff]
        %v664 = vld [vmem:[#allocation8 + $0x3d8] sm:$0xff]
        %v665 = vld [vmem:[#allocation8 + $0x3e0] sm:$0xff]
        %v666 = vld [vmem:[#allocation8 + $0x3e8] sm:$0xff]
        %v667 = vld [vmem:[#allocation8 + $0x3f0] sm:$0xff]
        %v668 = vld [vmem:[#allocation8 + $0x3f8] sm:$0xff]
        %v669 = vld [vmem:[%s4] sm:$0x3]
        %v671 = vperm.slane %v669, 0
        %v672 = vperm.slane %v669, 1
        %675 = vmatpush.msra.mxu0 %v571
        %676 = vmatpush.msra.mxu0 %v569
        %677 = vmatpush.msra.mxu0 %v567
        %678 = vmatpush.msra.mxu0 %v565
        %679 = vmatpush.msra.mxu0 %v563
        %680 = vmatpush.msra.mxu0 %v561
        %681 = vmatpush.msra.mxu0 %v559
        %682 = vmatpush.msra.mxu0 %v557
        %683 = vmatpush.msra.mxu0 %v555
        %684 = vmatpush.msra.mxu0 %v553
        %685 = vmatpush.msra.mxu0 %v551
        %686 = vmatpush.msra.mxu0 %v549
        %687 = vmatpush.msra.mxu0 %v547
        %688 = vmatpush.msra.mxu0 %v545
        %689 = vmatpush.msra.mxu0 %v543
        %690 = vmatpush.msra.mxu0 %v541
        %691 = vmatmul.f32.gmra.mxu0 %v533
        %v692 = vpop.f32.mrf.mxu0
        %v693 = vadd.f32 %v671, %v692
        %694 = vmatmul.f32.gmra.mxu0 %v537
        %v695 = vpop.f32.mrf.mxu0
        %v696 = vadd.f32 %v671, %v695
        %697 = vdwg.mxu0
        %698 = vmatpush.msra.mxu0 %v603
        %699 = vmatpush.msra.mxu0 %v601
        %700 = vmatpush.msra.mxu0 %v599
        %701 = vmatpush.msra.mxu0 %v597
        %702 = vmatpush.msra.mxu0 %v595
        %703 = vmatpush.msra.mxu0 %v593
        %704 = vmatpush.msra.mxu0 %v591
        %705 = vmatpush.msra.mxu0 %v589
        %706 = vmatpush.msra.mxu0 %v587
        %707 = vmatpush.msra.mxu0 %v585
        %708 = vmatpush.msra.mxu0 %v583
        %709 = vmatpush.msra.mxu0 %v581
        %710 = vmatpush.msra.mxu0 %v579
        %711 = vmatpush.msra.mxu0 %v577
        %712 = vmatpush.msra.mxu0 %v575
        %713 = vmatpush.msra.mxu0 %v573
        %714 = vmatmul.f32.gmra.mxu0 %v534
        %v715 = vpop.f32.mrf.mxu0
        %v716 = vadd.f32 %v693, %v715
        %717 = vmatmul.f32.gmra.mxu0 %v538
        %v718 = vpop.f32.mrf.mxu0
        %v719 = vadd.f32 %v696, %v718
        %720 = vdwg.mxu0
        %721 = vmatpush.msra.mxu0 %v635
        %722 = vmatpush.msra.mxu0 %v633
        %723 = vmatpush.msra.mxu0 %v631
        %724 = vmatpush.msra.mxu0 %v629
        %725 = vmatpush.msra.mxu0 %v627
        %726 = vmatpush.msra.mxu0 %v625
        %727 = vmatpush.msra.mxu0 %v623
        %728 = vmatpush.msra.mxu0 %v621
        %729 = vmatpush.msra.mxu0 %v619
        %730 = vmatpush.msra.mxu0 %v617
        %731 = vmatpush.msra.mxu0 %v615
        %732 = vmatpush.msra.mxu0 %v613
        %733 = vmatpush.msra.mxu0 %v611
        %734 = vmatpush.msra.mxu0 %v609
        %735 = vmatpush.msra.mxu0 %v607
        %736 = vmatpush.msra.mxu0 %v605
        %737 = vmatmul.f32.gmra.mxu0 %v535
        %v738 = vpop.f32.mrf.mxu0
        %v739 = vadd.f32 %v716, %v738
        %740 = vmatmul.f32.gmra.mxu0 %v539
        %v741 = vpop.f32.mrf.mxu0
        %v742 = vadd.f32 %v719, %v741
        %743 = vdwg.mxu0
        %744 = vmatpush.msra.mxu0 %v667
        %745 = vmatpush.msra.mxu0 %v665
        %746 = vmatpush.msra.mxu0 %v663
        %747 = vmatpush.msra.mxu0 %v661
        %748 = vmatpush.msra.mxu0 %v659
        %749 = vmatpush.msra.mxu0 %v657
        %750 = vmatpush.msra.mxu0 %v655
        %751 = vmatpush.msra.mxu0 %v653
        %752 = vmatpush.msra.mxu0 %v651
        %753 = vmatpush.msra.mxu0 %v649
        %754 = vmatpush.msra.mxu0 %v647
        %755 = vmatpush.msra.mxu0 %v645
        %756 = vmatpush.msra.mxu0 %v643
        %757 = vmatpush.msra.mxu0 %v641
        %758 = vmatpush.msra.mxu0 %v639
        %759 = vmatpush.msra.mxu0 %v637
        %760 = vmatmul.f32.gmra.mxu0 %v536
        %v761 = vpop.f32.mrf.mxu0
        %v762 = vadd.f32 %v739, %v761
        %763 = vmatmul.f32.gmra.mxu0 %v540
        %v764 = vpop.f32.mrf.mxu0
        %v765 = vadd.f32 %v742, %v764
        %766 = vdwg.mxu0
        %767 = vmatpush.msra.mxu0 %v572
        %768 = vmatpush.msra.mxu0 %v570
        %769 = vmatpush.msra.mxu0 %v568
        %770 = vmatpush.msra.mxu0 %v566
        %771 = vmatpush.msra.mxu0 %v564
        %772 = vmatpush.msra.mxu0 %v562
        %773 = vmatpush.msra.mxu0 %v560
        %774 = vmatpush.msra.mxu0 %v558
        %775 = vmatpush.msra.mxu0 %v556
        %776 = vmatpush.msra.mxu0 %v554
        %777 = vmatpush.msra.mxu0 %v552
        %778 = vmatpush.msra.mxu0 %v550
        %779 = vmatpush.msra.mxu0 %v548
        %780 = vmatpush.msra.mxu0 %v546
        %781 = vmatpush.msra.mxu0 %v544
        %782 = vmatpush.msra.mxu0 %v542
        %783 = vmatmul.f32.gmra.mxu0 %v533
        %v784 = vpop.f32.mrf.mxu0
        %v785 = vadd.f32 %v672, %v784
        %786 = vmatmul.f32.gmra.mxu0 %v537
        %v787 = vpop.f32.mrf.mxu0
        %v788 = vadd.f32 %v672, %v787
        %789 = vdwg.mxu0
        %790 = vmatpush.msra.mxu0 %v604
        %791 = vmatpush.msra.mxu0 %v602
        %792 = vmatpush.msra.mxu0 %v600
        %793 = vmatpush.msra.mxu0 %v598
        %794 = vmatpush.msra.mxu0 %v596
        %795 = vmatpush.msra.mxu0 %v594
        %796 = vmatpush.msra.mxu0 %v592
        %797 = vmatpush.msra.mxu0 %v590
        %798 = vmatpush.msra.mxu0 %v588
        %799 = vmatpush.msra.mxu0 %v586
        %800 = vmatpush.msra.mxu0 %v584
        %801 = vmatpush.msra.mxu0 %v582
        %802 = vmatpush.msra.mxu0 %v580
        %803 = vmatpush.msra.mxu0 %v578
        %804 = vmatpush.msra.mxu0 %v576
        %805 = vmatpush.msra.mxu0 %v574
        %806 = vmatmul.f32.gmra.mxu0 %v534
        %v807 = vpop.f32.mrf.mxu0
        %v808 = vadd.f32 %v785, %v807
        %809 = vmatmul.f32.gmra.mxu0 %v538
        %v810 = vpop.f32.mrf.mxu0
        %v811 = vadd.f32 %v788, %v810
        %812 = vdwg.mxu0
        %813 = vmatpush.msra.mxu0 %v636
        %814 = vmatpush.msra.mxu0 %v634
        %815 = vmatpush.msra.mxu0 %v632
        %816 = vmatpush.msra.mxu0 %v630
        %817 = vmatpush.msra.mxu0 %v628
        %818 = vmatpush.msra.mxu0 %v626
        %819 = vmatpush.msra.mxu0 %v624
        %820 = vmatpush.msra.mxu0 %v622
        %821 = vmatpush.msra.mxu0 %v620
        %822 = vmatpush.msra.mxu0 %v618
        %823 = vmatpush.msra.mxu0 %v616
        %824 = vmatpush.msra.mxu0 %v614
        %825 = vmatpush.msra.mxu0 %v612
        %826 = vmatpush.msra.mxu0 %v610
        %827 = vmatpush.msra.mxu0 %v608
        %828 = vmatpush.msra.mxu0 %v606
        %829 = vmatmul.f32.gmra.mxu0 %v535
        %v830 = vpop.f32.mrf.mxu0
        %v831 = vadd.f32 %v808, %v830
        %832 = vmatmul.f32.gmra.mxu0 %v539
        %v833 = vpop.f32.mrf.mxu0
        %v834 = vadd.f32 %v811, %v833
        %835 = vdwg.mxu0
        %836 = vmatpush.msra.mxu0 %v668
        %837 = vmatpush.msra.mxu0 %v666
        %838 = vmatpush.msra.mxu0 %v664
        %839 = vmatpush.msra.mxu0 %v662
        %840 = vmatpush.msra.mxu0 %v660
        %841 = vmatpush.msra.mxu0 %v658
        %842 = vmatpush.msra.mxu0 %v656
        %843 = vmatpush.msra.mxu0 %v654
        %844 = vmatpush.msra.mxu0 %v652
        %845 = vmatpush.msra.mxu0 %v650
        %846 = vmatpush.msra.mxu0 %v648
        %847 = vmatpush.msra.mxu0 %v646
        %848 = vmatpush.msra.mxu0 %v644
        %849 = vmatpush.msra.mxu0 %v642
        %850 = vmatpush.msra.mxu0 %v640
        %851 = vmatpush.msra.mxu0 %v638
        %852 = vmatmul.f32.gmra.mxu0 %v536
        %v853 = vpop.f32.mrf.mxu0
        %v854 = vadd.f32 %v831, %v853
        %855 = vmatmul.f32.gmra.mxu0 %v540
        %v856 = vpop.f32.mrf.mxu0
        %v857 = vadd.f32 %v834, %v856
        %858 = vdwg.mxu0
        %v859 = vmax.f32 %v762, 0.0
        %v860 = vmax.f32 %v854, 0.0
        %v861 = vmax.f32 %v765, 0.0
        %v862 = vmax.f32 %v857, 0.0
        %v863 = vld [vmem:[#allocation10] sm:$0xff]
        %v864 = vld [vmem:[#allocation10 + $0x8] sm:$0xff]
        %v865 = vld [vmem:[#allocation10 + $0x10] sm:$0xff]
        %v866 = vld [vmem:[#allocation10 + $0x18] sm:$0xff]
        %v867 = vld [vmem:[#allocation10 + $0x20] sm:$0xff]
        %v868 = vld [vmem:[#allocation10 + $0x28] sm:$0xff]
        %v869 = vld [vmem:[#allocation10 + $0x30] sm:$0xff]
        %v870 = vld [vmem:[#allocation10 + $0x38] sm:$0xff]
        %v871 = vld [vmem:[#allocation10 + $0x40] sm:$0xff]
        %v872 = vld [vmem:[#allocation10 + $0x48] sm:$0xff]
        %v873 = vld [vmem:[#allocation10 + $0x50] sm:$0xff]
        %v874 = vld [vmem:[#allocation10 + $0x58] sm:$0xff]
        %v875 = vld [vmem:[#allocation10 + $0x60] sm:$0xff]
        %v876 = vld [vmem:[#allocation10 + $0x68] sm:$0xff]
        %v877 = vld [vmem:[#allocation10 + $0x70] sm:$0xff]
        %v878 = vld [vmem:[#allocation10 + $0x78] sm:$0xff]
        %v879 = vld [vmem:[#allocation10 + $0x80] sm:$0xff]
        %v880 = vld [vmem:[#allocation10 + $0x88] sm:$0xff]
        %v881 = vld [vmem:[#allocation10 + $0x90] sm:$0xff]
        %v882 = vld [vmem:[#allocation10 + $0x98] sm:$0xff]
        %v883 = vld [vmem:[#allocation10 + $0xa0] sm:$0xff]
        %v884 = vld [vmem:[#allocation10 + $0xa8] sm:$0xff]
        %v885 = vld [vmem:[#allocation10 + $0xb0] sm:$0xff]
        %v886 = vld [vmem:[#allocation10 + $0xb8] sm:$0xff]
        %v887 = vld [vmem:[#allocation10 + $0xc0] sm:$0xff]
        %v888 = vld [vmem:[#allocation10 + $0xc8] sm:$0xff]
        %v889 = vld [vmem:[#allocation10 + $0xd0] sm:$0xff]
        %v890 = vld [vmem:[#allocation10 + $0xd8] sm:$0xff]
        %v891 = vld [vmem:[#allocation10 + $0xe0] sm:$0xff]
        %v892 = vld [vmem:[#allocation10 + $0xe8] sm:$0xff]
        %v893 = vld [vmem:[#allocation10 + $0xf0] sm:$0xff]
        %v894 = vld [vmem:[#allocation10 + $0xf8] sm:$0xff]
        %v895 = vld [vmem:[%s6] sm:$0x1]
        %v897 = vperm.slane %v895, 0
        %899 = vmatpush.msra.mxu0 %v878
        %900 = vmatpush.msra.mxu0 %v877
        %901 = vmatpush.msra.mxu0 %v876
        %902 = vmatpush.msra.mxu0 %v875
        %903 = vmatpush.msra.mxu0 %v874
        %904 = vmatpush.msra.mxu0 %v873
        %905 = vmatpush.msra.mxu0 %v872
        %906 = vmatpush.msra.mxu0 %v871
        %907 = vmatpush.msra.mxu0 %v870
        %908 = vmatpush.msra.mxu0 %v869
        %909 = vmatpush.msra.mxu0 %v868
        %910 = vmatpush.msra.mxu0 %v867
        %911 = vmatpush.msra.mxu0 %v866
        %912 = vmatpush.msra.mxu0 %v865
        %913 = vmatpush.msra.mxu0 %v864
        %914 = vmatpush.msra.mxu0 %v863
        %915 = vmatmul.f32.gmra.mxu0 %v859
        %v916 = vpop.f32.mrf.mxu0
        %v917 = vadd.f32 %v897, %v916
        %918 = vmatmul.f32.gmra.mxu0 %v861
        %v919 = vpop.f32.mrf.mxu0
        %v920 = vadd.f32 %v897, %v919
        %921 = vdwg.mxu0
        %922 = vmatpush.msra.mxu0 %v894
        %923 = vmatpush.msra.mxu0 %v893
        %924 = vmatpush.msra.mxu0 %v892
        %925 = vmatpush.msra.mxu0 %v891
        %926 = vmatpush.msra.mxu0 %v890
        %927 = vmatpush.msra.mxu0 %v889
        %928 = vmatpush.msra.mxu0 %v888
        %929 = vmatpush.msra.mxu0 %v887
        %930 = vmatpush.msra.mxu0 %v886
        %931 = vmatpush.msra.mxu0 %v885
        %932 = vmatpush.msra.mxu0 %v884
        %933 = vmatpush.msra.mxu0 %v883
        %934 = vmatpush.msra.mxu0 %v882
        %935 = vmatpush.msra.mxu0 %v881
        %936 = vmatpush.msra.mxu0 %v880
        %937 = vmatpush.msra.mxu0 %v879
        %938 = vmatmul.f32.gmra.mxu0 %v860
        %v939 = vpop.f32.mrf.mxu0
        %v940 = vadd.f32 %v917, %v939
        %941 = vmatmul.f32.gmra.mxu0 %v862
        %v942 = vpop.f32.mrf.mxu0
        %v943 = vadd.f32 %v920, %v942
        %944 = vdwg.mxu0
        %945 = vst [vmem:[%s362] sm:$0xff] %v940
        %946 = vst [vmem:[%s362 + $0x8] sm:$0xff] %v943
        %s947 = sand.u32 %s186, 1
        %s948 = scalar_lea.sflag [#allocation4], %s947
        %s949 = sand.u32 %s186, 1
        %s950 = smul.addr %s949, 16
        %s951 = scalar_lea.vmem [#allocation11], %s950
        // Predicated region
        $region69: #{tpu_custom_call.1} parent=47 // pred_check
          %p952 = pneg %p196
        $region70: #{tpu_custom_call.1} parent=47 // pred_check_branch
          %954 = sbr.rel (%p952) target = $region72
        $region71: #{tpu_custom_call.1} parent=47 // pred_region
          %s955 = smul.u32 2, %s26
          %957 = vsyncadd %s948, 0
          %s958 = smul.addr %s955, 8
          %s959 = scalar_lea.hbm %s7, %s958
          %s960 = sshll.u32 %s951, 4
          %s961 = int_to_ptr.vmem [resolvable:$true] %s960
          %s962 = sshll.u32 %s959, 4
          %s963 = int_to_ptr.hbm [resolvable:$true] %s962
          %968 = dma.vmem_to_hbm [thread:$0]  %s961, 256, %s963, %s948, 128, 128, 8
        $region72: #{tpu_custom_call.1} parent=47 // pred_fallthru
          _
      $region48: #{tpu_custom_call.1} parent=5 // pred_fallthru
        _
      %p969 = scmp.le.s32.totalorder 2, %s21
      // Predicated region
      $region73: #{tpu_custom_call.1} parent=5 // pred_check
        %p970 = pneg %p969
      $region74: #{tpu_custom_call.1} parent=5 // pred_check_branch
        %972 = sbr.rel (%p970) target = $region76
      $region75: #{tpu_custom_call.1} parent=5 // pred_region
        %s973 = ssub.s32 %s21, 2
        // Predicated region
        $region77: #{tpu_custom_call.1} parent=75 // pred_check
          %p974 = pneg %p202
        $region78: #{tpu_custom_call.1} parent=75 // pred_check_branch
          %976 = sbr.rel (%p974) target = $region80
        $region79: #{tpu_custom_call.1} parent=75 // pred_region
          %s977 = sand.u32 %s187, 1
          %s978 = scalar_lea.sflag [#allocation4], %s977
          %s979 = sand.u32 %s187, 1
          %s980 = smul.addr %s979, 16
          %s981 = scalar_lea.vmem [#allocation11], %s980
          %983 = dma.done %s978, 256
        $region80: #{tpu_custom_call.1} parent=75 // pred_fallthru
          _
      $region76: #{tpu_custom_call.1} parent=5 // pred_fallthru
        _
    $region6: #{tpu_custom_call.1} parent=1 // loop_footer
      %s25 = sadd.s32 1, %s21
    $region7: #{tpu_custom_call.1} parent=1 // loop_footer_branch
      %20 = sbr.rel target = $region3
    $region8: #{tpu_custom_call.1} parent=1 // loop_exit
      _
    %984 = vsyncpa [#allocation3], 1
    %s985 = scalar_lea.sflag [#allocation3], 1
    %986 = vsyncpa %s985, 1
    %987 = vsyncpa [#allocation6], 1
    %988 = vsyncpa [#allocation9], 1
    %989 = vsyncpa [#allocation4], 1
    %s990 = scalar_lea.sflag [#allocation4], 1
    %991 = vsyncpa %s990, 1

</llo_original>
